<compile_context>
chip_gen: v7x
topology: tpu7x:2x2x1
jax: 0.10.0
libtpu: 0.0.40
codegen_flags: <defaults>
</compile_context>

<pallas_src>
import functools

import jax
import jax.numpy as jnp
from jax.experimental import pallas as pl
from jax.experimental.pallas import tpu as pltpu

LEAKY_SLOPE = 0.01   # torch.nn.LeakyReLU default
BN_EPS = 1e-5        # nn.BatchNorm1d default


def dense_block_kernel(x_ref, w_ref, b_ref, g_ref, be_ref, o_ref, acc_ref,
                       *, n_valid, bn_eps, slope):
    k = pl.program_id(1)

    @pl.when(k == 0)
    def _init():
        acc_ref[...] = jnp.zeros_like(acc_ref)

    # x tile: [Np, tk]; w tile (PyTorch layout): [tn, tk] -> contract dim1 x dim1.
    # Operands stay in their native dtype (bf16 inputs hit the bf16 MXU path);
    # accumulation is always f32 via preferred_element_type.
    acc_ref[...] += jax.lax.dot_general(
        x_ref[...], w_ref[...],
        dimension_numbers=(((1,), (1,)), ((), ())),
        preferred_element_type=jnp.float32)

    @pl.when(k == pl.num_programs(1) - 1)
    def _finalize():
        y = acc_ref[...] + b_ref[...]             # bias (broadcast [1, tn])
        y = jnp.maximum(y, slope * y)             # LeakyReLU(0.01), single VALU op

        n_pad = y.shape[0]
        inv_n = 1.0 / n_valid
        if n_pad != n_valid:
            # Mask zero-padded batch rows out of the statistics.
            row_ids = jax.lax.broadcasted_iota(jnp.int32, (n_pad, 1), 0)
            ym = jnp.where(row_ids < n_valid, y, 0.0)
        else:
            ym = y

        # One-pass batch statistics (biased variance, matches BN train mode).
        s1 = jnp.sum(ym, axis=0, keepdims=True)
        s2 = jnp.sum(ym * ym, axis=0, keepdims=True)
        mean = s1 * inv_n
        var = jnp.maximum(s2 * inv_n - mean * mean, 0.0)

        # Fold gamma into inv_std and (mean, beta) into a single shift:
        #   out = y * scale + shift  -> only two passes over the (Np, tn) slab.
        scale = g_ref[...] * jax.lax.rsqrt(var + bn_eps)   # EUP rsqrt
        shift = be_ref[...] - mean * scale
        o_ref[...] = (y * scale + shift).astype(o_ref.dtype)


def _round_up(x, m):
    return (x + m - 1) // m * m


def dense_block(x, weight, bias, gamma, beta):
    """x: [N, in_f]; weight: [out_f, in_f] (PyTorch layout, NOT transposed)."""
    n, in_f = x.shape
    out_f, in_f_w = weight.shape
    assert in_f_w == in_f

    # MXU / lane-aligned tiles and padded dims.
    n_p = _round_up(max(n, 8), 8)                     # sublane-aligned batch
    tn = 256 if out_f >= 256 else 128                 # lane-dense output tile
    tk = 256 if in_f >= 256 else 128                  # reduction tile
    out_p = _round_up(out_f, tn)
    in_p = _round_up(in_f, tk)

    f32 = jnp.float32

    # Zero-pad only when needed (static shapes -> resolved at trace time).
    xp = x
    if (n_p, in_p) != (n, in_f):
        xp = jnp.zeros((n_p, in_p), x.dtype).at[:n, :in_f].set(x)
    wp = weight
    if (out_p, in_p) != (out_f, in_f):
        wp = jnp.zeros((out_p, in_p), weight.dtype).at[:out_f, :in_f].set(weight)

    bp = jnp.zeros((1, out_p), f32).at[0, :out_f].set(bias.astype(f32))
    gp = jnp.zeros((1, out_p), f32).at[0, :out_f].set(gamma.astype(f32))
    bep = jnp.zeros((1, out_p), f32).at[0, :out_f].set(beta.astype(f32))

    grid = (out_p // tn, in_p // tk)

    kernel = functools.partial(
        dense_block_kernel, n_valid=n, bn_eps=BN_EPS, slope=LEAKY_SLOPE)

    # VMEM budget: double-buffered x/w/param/out tiles + resident accumulator.
    tile_bytes = (2 * (n_p * tk + tn * tk + 3 * tn + n_p * tn) + n_p * tn) * 4
    vmem_limit = min(max(2 * tile_bytes, 8 << 20), 64 << 20)

    out = pl.pallas_call(
        kernel,
        out_shape=jax.ShapeDtypeStruct((n_p, out_p), f32),
        grid_spec=pltpu.PrefetchScalarGridSpec(
            num_scalar_prefetch=0,
            grid=grid,
            in_specs=[
                pl.BlockSpec((n_p, tk), lambda j, k: (0, k)),   # x column slab
                pl.BlockSpec((tn, tk), lambda j, k: (j, k)),    # weight tile
                pl.BlockSpec((1, tn), lambda j, k: (0, j)),     # bias
                pl.BlockSpec((1, tn), lambda j, k: (0, j)),     # gamma
                pl.BlockSpec((1, tn), lambda j, k: (0, j)),     # beta
            ],
            out_specs=pl.BlockSpec((n_p, tn), lambda j, k: (0, j)),
            scratch_shapes=[pltpu.VMEM((n_p, tn), jnp.float32)],
        ),
        compiler_params=pltpu.CompilerParams(
            dimension_semantics=("parallel", "arbitrary"),
            vmem_limit_bytes=vmem_limit,
        ),
        cost_estimate=pl.CostEstimate(
            flops=2 * n_p * in_p * out_p,
            transcendentals=0,
            bytes_accessed=(n_p * in_p + out_p * in_p + 2 * n_p * out_p) * 4,
        ),
    )(xp, wp, bp, gp, bep)

    return out[:n, :out_f]


def dense_block_ref(x, weight, bias, gamma, beta):
    """Pure-JAX reference matching PyTorch Dense_Block.forward (train mode)."""
    y = x @ weight.T + bias
    y = jnp.where(y >= 0.0, y, LEAKY_SLOPE * y)
    mean = jnp.mean(y, axis=0, keepdims=True)
    var = jnp.mean((y - mean) ** 2, axis=0, keepdims=True)
    return (y - mean) / jnp.sqrt(var + BN_EPS) * gamma + beta


def _make_params(key, n, in_f, out_f):
    k_x, k_w, k_b, k_g, k_be = jax.random.split(key, 5)
    x = jax.random.normal(k_x, (n, in_f), dtype=jnp.float32)
    bound = 1.0 / jnp.sqrt(in_f)
    weight = jax.random.uniform(k_w, (out_f, in_f), minval=-bound, maxval=bound,
                                dtype=jnp.float32)
    bias = jax.random.uniform(k_b, (out_f,), minval=-bound, maxval=bound,
                              dtype=jnp.float32)
    gamma = 1.0 + 0.1 * jax.random.normal(k_g, (out_f,), dtype=jnp.float32)
    beta = 0.1 * jax.random.normal(k_be, (out_f,), dtype=jnp.float32)
    return x, weight, bias, gamma, beta


if __name__ == "__main__":
    key = jax.random.PRNGKey(0)
    k1, k2 = jax.random.split(key)

    # Case 1: MXU/tile-aligned small shapes (fast path, no padding/masking).
    x, w, b, g, be = _make_params(k1, n=64, in_f=128, out_f=256)
    out = jax.block_until_ready(dense_block(x, w, b, g, be))
    ref = dense_block_ref(x, w, b, g, be)
    assert out.shape == (64, 256)
    assert jnp.allclose(out, ref, atol=1e-4, rtol=1e-4), "mismatch (aligned case)"

    # Case 2: unaligned shapes exercise batch-row masking and feature padding.
    x2, w2, b2, g2, be2 = _make_params(k2, n=10, in_f=48, out_f=96)
    out2 = jax.block_until_ready(dense_block(x2, w2, b2, g2, be2))
    ref2 = dense_block_ref(x2, w2, b2, g2, be2)
    assert out2.shape == (10, 96)
    assert jnp.allclose(out2, ref2, atol=1e-4, rtol=1e-4), "mismatch (padded case)"

    print("KERNEL_OK")
</pallas_src>

<mosaic_0001>
module attributes {stable_mosaic.version = 11 : i64} {
  func.func @dense_block_kernel(%arg0: i32, %arg1: i32, %arg2: memref<64x128xf32, #tpu.memory_space<vmem>>, %arg3: memref<256x128xf32, #tpu.memory_space<vmem>>, %arg4: memref<1x256xf32, #tpu.memory_space<vmem>>, %arg5: memref<1x256xf32, #tpu.memory_space<vmem>>, %arg6: memref<1x256xf32, #tpu.memory_space<vmem>>, %arg7: memref<64x256xf32, #tpu.memory_space<vmem>>, %arg8: memref<64x256xf32, #tpu.memory_space<vmem>>) attributes {dimension_semantics = [#tpu.dimension_semantics<parallel>, #tpu.dimension_semantics<arbitrary>], iteration_bounds = array<i64: 1, 1>, scalar_prefetch = 0 : i64, scratch_operands = 1 : i64, tpu.core_type = #tpu.core_type<tc>, window_params = [{transform_indices = @transform_0, window_bounds = array<i64: 64, 128>}, {transform_indices = @transform_1, window_bounds = array<i64: 256, 128>}, {transform_indices = @transform_2, window_bounds = array<i64: 1, 256>}, {transform_indices = @transform_3, window_bounds = array<i64: 1, 256>}, {transform_indices = @transform_4, window_bounds = array<i64: 1, 256>}, {transform_indices = @transform_5, window_bounds = array<i64: 64, 256>}]} {
    %c0_i32 = arith.constant 0 : i32
    %0 = arith.cmpi eq, %arg1, %c0_i32 : i32
    %1 = arith.extui %0 : i1 to i32
    %c0_i32_0 = arith.constant 0 : i32
    %2 = arith.cmpi ne, %1, %c0_i32_0 : i32
    scf.if %2 {
      %cst_10 = arith.constant 0.000000e+00 : f32
      %12 = vector.broadcast %cst_10 : f32 to vector<64x256xf32>
      %c0_11 = arith.constant 0 : index
      %c0_12 = arith.constant 0 : index
      %13 = vector.load %arg8[%c0_11, %c0_12] : memref<64x256xf32, #tpu.memory_space<vmem>>, vector<64x256xf32>
      tpu.vector_store %arg8[%c0_11, %c0_12], %12 {strides = array<i32>} : memref<64x256xf32, #tpu.memory_space<vmem>>, vector<64x256xf32>,
    } else {
    }
    %c0 = arith.constant 0 : index
    %c0_1 = arith.constant 0 : index
    %3 = vector.load %arg8[%c0, %c0_1] : memref<64x256xf32, #tpu.memory_space<vmem>>, vector<64x256xf32>
    %c0_2 = arith.constant 0 : index
    %c0_3 = arith.constant 0 : index
    %4 = vector.load %arg2[%c0_2, %c0_3] : memref<64x128xf32, #tpu.memory_space<vmem>>, vector<64x128xf32>
    %c0_4 = arith.constant 0 : index
    %c0_5 = arith.constant 0 : index
    %5 = vector.load %arg3[%c0_4, %c0_5] : memref<256x128xf32, #tpu.memory_space<vmem>>, vector<256x128xf32>
    %cst = arith.constant dense<0.000000e+00> : vector<64x256xf32>
    %6 = tpu.matmul %4, %5, %cst {dimension_numbers = #tpu.dot_dimension_numbers<[1], [1], [0], [0], [0, 0, 1, 0], [], []>} : vector<64x128xf32>, vector<256x128xf32>, vector<64x256xf32> -> vector<64x256xf32>
    %7 = arith.addf %3, %6 : vector<64x256xf32>
    %c0_6 = arith.constant 0 : index
    %c0_7 = arith.constant 0 : index
    %8 = vector.load %arg8[%c0_6, %c0_7] : memref<64x256xf32, #tpu.memory_space<vmem>>, vector<64x256xf32>
    tpu.vector_store %arg8[%c0_6, %c0_7], %7 {strides = array<i32>} : memref<64x256xf32, #tpu.memory_space<vmem>>, vector<64x256xf32>,
    %c0_i32_8 = arith.constant 0 : i32
    %9 = arith.cmpi eq, %arg1, %c0_i32_8 : i32
    %10 = arith.extui %9 : i1 to i32
    %c0_i32_9 = arith.constant 0 : i32
    %11 = arith.cmpi ne, %10, %c0_i32_9 : i32
    scf.if %11 {
      %c0_10 = arith.constant 0 : index
      %c0_11 = arith.constant 0 : index
      %12 = vector.load %arg8[%c0_10, %c0_11] : memref<64x256xf32, #tpu.memory_space<vmem>>, vector<64x256xf32>
      %c0_12 = arith.constant 0 : index
      %c0_13 = arith.constant 0 : index
      %13 = vector.load %arg4[%c0_12, %c0_13] : memref<1x256xf32, #tpu.memory_space<vmem>>, vector<1x256xf32>
      %14 = vector.broadcast %13 : vector<1x256xf32> to vector<64x256xf32>
      %15 = arith.addf %12, %14 : vector<64x256xf32>
      %cst_14 = arith.constant 0.00999999977 : f32
      %16 = vector.broadcast %cst_14 : f32 to vector<64x256xf32>
      %17 = arith.mulf %16, %15 : vector<64x256xf32>
      %18 = arith.maximumf %15, %17 : vector<64x256xf32>
      %cst_15 = arith.constant dense<0.000000e+00> : vector<256xf32>
      %19 = vector.multi_reduction <add>, %18, %cst_15 [0] : vector<64x256xf32> to vector<256xf32>
      %20 = vector.shape_cast %19 : vector<256xf32> to vector<1x256xf32>
      %21 = arith.mulf %18, %18 : vector<64x256xf32>
      %cst_16 = arith.constant dense<0.000000e+00> : vector<256xf32>
      %22 = vector.multi_reduction <add>, %21, %cst_16 [0] : vector<64x256xf32> to vector<256xf32>
      %23 = vector.shape_cast %22 : vector<256xf32> to vector<1x256xf32>
      %cst_17 = arith.constant 1.562500e-02 : f32
      %24 = vector.broadcast %cst_17 : f32 to vector<1x256xf32>
      %25 = arith.mulf %20, %24 : vector<1x256xf32>
      %cst_18 = arith.constant 1.562500e-02 : f32
      %26 = vector.broadcast %cst_18 : f32 to vector<1x256xf32>
      %27 = arith.mulf %23, %26 : vector<1x256xf32>
      %28 = arith.mulf %25, %25 : vector<1x256xf32>
      %29 = arith.subf %27, %28 : vector<1x256xf32>
      %cst_19 = arith.constant 0.000000e+00 : f32
      %30 = vector.broadcast %cst_19 : f32 to vector<1x256xf32>
      %31 = arith.maximumf %29, %30 : vector<1x256xf32>
      %c0_20 = arith.constant 0 : index
      %c0_21 = arith.constant 0 : index
      %32 = vector.load %arg5[%c0_20, %c0_21] : memref<1x256xf32, #tpu.memory_space<vmem>>, vector<1x256xf32>
      %cst_22 = arith.constant 9.99999974E-6 : f32
      %33 = vector.broadcast %cst_22 : f32 to vector<1x256xf32>
      %34 = arith.addf %31, %33 : vector<1x256xf32>
      %35 = math.rsqrt %34 : vector<1x256xf32>
      %36 = arith.mulf %32, %35 : vector<1x256xf32>
      %c0_23 = arith.constant 0 : index
      %c0_24 = arith.constant 0 : index
      %37 = vector.load %arg6[%c0_23, %c0_24] : memref<1x256xf32, #tpu.memory_space<vmem>>, vector<1x256xf32>
      %38 = arith.mulf %25, %36 : vector<1x256xf32>
      %39 = arith.subf %37, %38 : vector<1x256xf32>
      %40 = vector.broadcast %36 : vector<1x256xf32> to vector<64x256xf32>
      %41 = arith.mulf %18, %40 : vector<64x256xf32>
      %42 = vector.broadcast %39 : vector<1x256xf32> to vector<64x256xf32>
      %43 = arith.addf %41, %42 : vector<64x256xf32>
      %c0_25 = arith.constant 0 : index
      %c0_26 = arith.constant 0 : index
      %44 = vector.load %arg7[%c0_25, %c0_26] : memref<64x256xf32, #tpu.memory_space<vmem>>, vector<64x256xf32>
      tpu.vector_store %arg7[%c0_25, %c0_26], %43 {strides = array<i32>} : memref<64x256xf32, #tpu.memory_space<vmem>>, vector<64x256xf32>,
    } else {
    }
    return
  }
  func.func @transform_0(%arg0: i32, %arg1: i32) -> (i32, i32) {
    %c0_i32 = arith.constant 0 : i32
    %c0_i32_0 = arith.constant 0 : i32
    return %c0_i32, %arg1 : i32, i32
  }
  func.func @transform_1(%arg0: i32, %arg1: i32) -> (i32, i32) {
    %c0_i32 = arith.constant 0 : i32
    return %arg0, %arg1 : i32, i32
  }
  func.func @transform_2(%arg0: i32, %arg1: i32) -> (i32, i32) {
    %c0_i32 = arith.constant 0 : i32
    %c0_i32_0 = arith.constant 0 : i32
    return %c0_i32, %arg0 : i32, i32
  }
  func.func @transform_3(%arg0: i32, %arg1: i32) -> (i32, i32) {
    %c0_i32 = arith.constant 0 : i32
    %c0_i32_0 = arith.constant 0 : i32
    return %c0_i32, %arg0 : i32, i32
  }
  func.func @transform_4(%arg0: i32, %arg1: i32) -> (i32, i32) {
    %c0_i32 = arith.constant 0 : i32
    %c0_i32_0 = arith.constant 0 : i32
    return %c0_i32, %arg0 : i32, i32
  }
  func.func @transform_5(%arg0: i32, %arg1: i32) -> (i32, i32) {
    %c0_i32 = arith.constant 0 : i32
    %c0_i32_0 = arith.constant 0 : i32
    return %c0_i32, %arg0 : i32, i32
  }
}

</mosaic_0001>

<llo_original>
// kernel: tpu_custom_call.1
$region0: #{tpu_custom_call.1}
  #allocation0 [shape = 'u32[]', space=smem, size = 0x4, offset = 0x4, fixed_abs, tag = 'smem constant byte address 0x4 - core index']
  #allocation1 [shape = 'u32[144,128]{1,0:T(1,128)}', space=vmem, size = 0x12000, scoped, tag = 'internal scratch']
  #allocation2 [shape = 'f32[64,256]{1,0:T(8,128)}', space=vmem, size = 0x10000, scoped, tag = 'scratch operand']
  %s0 = inlined_call_operand.hbm [shape: f32[64,128], index: 0, kind: input, shape index: {}]
  %s1 = inlined_call_operand.hbm [shape: f32[256,128], index: 1, kind: input, shape index: {}]
  %s2 = inlined_call_operand.vmem [shape: f32[1,256], index: 2, kind: input, shape index: {}]
  %s3 = inlined_call_operand.vmem [shape: f32[1,256], index: 3, kind: input, shape index: {}]
  %s4 = inlined_call_operand.vmem [shape: f32[1,256], index: 4, kind: input, shape index: {}]
  %s5 = inlined_call_operand.hbm [shape: f32[64,256], index: 5, kind: output, shape index: {}]
  %s6 = sld [smem:[#allocation0]]
  $region46: #{tpu_custom_call.1} parent=0
    _
  %s8 = ssub.s32 1, %s6
  %s9 = scalar_select 0, %s8, %s6
  $region1: #{tpu_custom_call.1} parent=0
    #allocation3 [shape = 'u8[32768]{0}', space=vmem, size = 0x8000, scoped, tag = 'input window, operand 0, single buffered']
    #allocation4 [shape = 's32[1]{0}', space=sflag, size = 0x4, scoped, tag = 'scoped memory for tpu_custom_call.1']
    #allocation5 [shape = 's32[1]{0}', space=sflag, size = 0x4, scoped, tag = 'scoped memory for tpu_custom_call.1']
    #allocation6 [shape = 'u8[131072]{0}', space=vmem, size = 0x20000, scoped, tag = 'input window, operand 1, single buffered']
    #allocation7 [shape = 's32[1]{0}', space=sflag, size = 0x4, scoped, tag = 'scoped memory for tpu_custom_call.1']
    #allocation8 [shape = 'u8[65536]{0}', space=vmem, size = 0x10000, scoped, tag = 'output window, operand 0, single buffered']
    %10 = vsyncpa [#allocation4], 0
    %11 = vsyncpa [#allocation7], 0
    %12 = vsyncpa [#allocation5], 0
    // Predicated region
    $region2: #{tpu_custom_call.1} parent=1 // pred_check
      _
    $region3: #{tpu_custom_call.1} parent=1 // pred_check_branch
      %14 = sbr.rel (0) target = $region5
    $region4: #{tpu_custom_call.1} parent=1 // pred_region
      %s16 = ssub.s32 1024, 1024
      %17 = vsyncadd [#allocation4], %s16
      %s18 = sshll.u32 [#allocation3], 4
      %s19 = int_to_ptr.vmem [resolvable:$true] %s18
      %24 = dma.hbm_to_vmem [thread:$0]  %s0, 1024, %s19, [#allocation4], 128, 128, 8
    $region5: #{tpu_custom_call.1} parent=1 // pred_fallthru
      _
    // Predicated region
    $region6: #{tpu_custom_call.1} parent=1 // pred_check
      _
    $region7: #{tpu_custom_call.1} parent=1 // pred_check_branch
      %26 = sbr.rel (0) target = $region9
    $region8: #{tpu_custom_call.1} parent=1 // pred_region
      %s28 = ssub.s32 4096, 4096
      %29 = vsyncadd [#allocation7], %s28
      %s30 = sshll.u32 [#allocation6], 4
      %s31 = int_to_ptr.vmem [resolvable:$true] %s30
      %36 = dma.hbm_to_vmem [thread:$0]  %s1, 4096, %s31, [#allocation7], 128, 128, 8
    $region9: #{tpu_custom_call.1} parent=1 // pred_fallthru
      _
    // Predicated region
    $region10: #{tpu_custom_call.1} parent=1 // pred_check
      _
    $region11: #{tpu_custom_call.1} parent=1 // pred_check_branch
      %38 = sbr.rel (0) target = $region13
    $region12: #{tpu_custom_call.1} parent=1 // pred_region
      _
    $region13: #{tpu_custom_call.1} parent=1 // pred_fallthru
      _
    // Predicated region
    $region14: #{tpu_custom_call.1} parent=1 // pred_check
      _
    $region15: #{tpu_custom_call.1} parent=1 // pred_check_branch
      %40 = sbr.rel (0) target = $region17
    $region16: #{tpu_custom_call.1} parent=1 // pred_region
      _
    $region17: #{tpu_custom_call.1} parent=1 // pred_fallthru
      _
    // Predicated region
    $region18: #{tpu_custom_call.1} parent=1 // pred_check
      _
    $region19: #{tpu_custom_call.1} parent=1 // pred_check_branch
      %42 = sbr.rel (0) target = $region21
    $region20: #{tpu_custom_call.1} parent=1 // pred_region
      _
    $region21: #{tpu_custom_call.1} parent=1 // pred_fallthru
      _
    // Predicated region
    $region22: #{tpu_custom_call.1} parent=1 // pred_check
      _
    $region23: #{tpu_custom_call.1} parent=1 // pred_check_branch
      %44 = sbr.rel (0) target = $region25
    $region24: #{tpu_custom_call.1} parent=1 // pred_region
      %45 = dma.done [#allocation4], 1024
    $region25: #{tpu_custom_call.1} parent=1 // pred_fallthru
      _
    // Predicated region
    $region26: #{tpu_custom_call.1} parent=1 // pred_check
      _
    $region27: #{tpu_custom_call.1} parent=1 // pred_check_branch
      %47 = sbr.rel (0) target = $region29
    $region28: #{tpu_custom_call.1} parent=1 // pred_region
      %48 = dma.done [#allocation7], 4096
    $region29: #{tpu_custom_call.1} parent=1 // pred_fallthru
      _
    %p49 = scmp.eq.s32.totalorder 0, 0
    // Predicated region
    $region30: #{tpu_custom_call.1} parent=1 // pred_check
      %p50 = pneg %p49
    $region31: #{tpu_custom_call.1} parent=1 // pred_check_branch
      %52 = sbr.rel (%p50) target = $region33
    $region32: #{tpu_custom_call.1} parent=1 // pred_region
      %53 = vst [vmem:[#allocation2] sm:$0xff] 0.0
      %54 = vst [vmem:[#allocation2 + $0x8] sm:$0xff] 0.0
      %55 = vst [vmem:[#allocation2 + $0x10] sm:$0xff] 0.0
      %56 = vst [vmem:[#allocation2 + $0x18] sm:$0xff] 0.0
      %57 = vst [vmem:[#allocation2 + $0x20] sm:$0xff] 0.0
      %58 = vst [vmem:[#allocation2 + $0x28] sm:$0xff] 0.0
      %59 = vst [vmem:[#allocation2 + $0x30] sm:$0xff] 0.0
      %60 = vst [vmem:[#allocation2 + $0x38] sm:$0xff] 0.0
      %61 = vst [vmem:[#allocation2 + $0x40] sm:$0xff] 0.0
      %62 = vst [vmem:[#allocation2 + $0x48] sm:$0xff] 0.0
      %63 = vst [vmem:[#allocation2 + $0x50] sm:$0xff] 0.0
      %64 = vst [vmem:[#allocation2 + $0x58] sm:$0xff] 0.0
      %65 = vst [vmem:[#allocation2 + $0x60] sm:$0xff] 0.0
      %66 = vst [vmem:[#allocation2 + $0x68] sm:$0xff] 0.0
      %67 = vst [vmem:[#allocation2 + $0x70] sm:$0xff] 0.0
      %68 = vst [vmem:[#allocation2 + $0x78] sm:$0xff] 0.0
    $region33: #{tpu_custom_call.1} parent=1 // pred_fallthru
      _
    %v69 = vld [vmem:[#allocation2] sm:$0xff]
    %v70 = vld [vmem:[#allocation2 + $0x8] sm:$0xff]
    %v71 = vld [vmem:[#allocation2 + $0x10] sm:$0xff]
    %v72 = vld [vmem:[#allocation2 + $0x18] sm:$0xff]
    %v73 = vld [vmem:[#allocation2 + $0x20] sm:$0xff]
    %v74 = vld [vmem:[#allocation2 + $0x28] sm:$0xff]
    %v75 = vld [vmem:[#allocation2 + $0x30] sm:$0xff]
    %v76 = vld [vmem:[#allocation2 + $0x38] sm:$0xff]
    %v77 = vld [vmem:[#allocation2 + $0x40] sm:$0xff]
    %v78 = vld [vmem:[#allocation2 + $0x48] sm:$0xff]
    %v79 = vld [vmem:[#allocation2 + $0x50] sm:$0xff]
    %v80 = vld [vmem:[#allocation2 + $0x58] sm:$0xff]
    %v81 = vld [vmem:[#allocation2 + $0x60] sm:$0xff]
    %v82 = vld [vmem:[#allocation2 + $0x68] sm:$0xff]
    %v83 = vld [vmem:[#allocation2 + $0x70] sm:$0xff]
    %v84 = vld [vmem:[#allocation2 + $0x78] sm:$0xff]
    %v85 = vld [vmem:[#allocation3] sm:$0xff]
    %v86 = vld [vmem:[#allocation3 + $0x8] sm:$0xff]
    %v87 = vld [vmem:[#allocation3 + $0x10] sm:$0xff]
    %v88 = vld [vmem:[#allocation3 + $0x18] sm:$0xff]
    %v89 = vld [vmem:[#allocation3 + $0x20] sm:$0xff]
    %v90 = vld [vmem:[#allocation3 + $0x28] sm:$0xff]
    %v91 = vld [vmem:[#allocation3 + $0x30] sm:$0xff]
    %v92 = vld [vmem:[#allocation3 + $0x38] sm:$0xff]
    %v93 = vld [vmem:[#allocation6] sm:$0xff]
    %v94 = vld [vmem:[#allocation6 + $0x8] sm:$0xff]
    %v95 = vld [vmem:[#allocation6 + $0x10] sm:$0xff]
    %v96 = vld [vmem:[#allocation6 + $0x18] sm:$0xff]
    %v97 = vld [vmem:[#allocation6 + $0x20] sm:$0xff]
    %v98 = vld [vmem:[#allocation6 + $0x28] sm:$0xff]
    %v99 = vld [vmem:[#allocation6 + $0x30] sm:$0xff]
    %v100 = vld [vmem:[#allocation6 + $0x38] sm:$0xff]
    %v101 = vld [vmem:[#allocation6 + $0x40] sm:$0xff]
    %v102 = vld [vmem:[#allocation6 + $0x48] sm:$0xff]
    %v103 = vld [vmem:[#allocation6 + $0x50] sm:$0xff]
    %v104 = vld [vmem:[#allocation6 + $0x58] sm:$0xff]
    %v105 = vld [vmem:[#allocation6 + $0x60] sm:$0xff]
    %v106 = vld [vmem:[#allocation6 + $0x68] sm:$0xff]
    %v107 = vld [vmem:[#allocation6 + $0x70] sm:$0xff]
    %v108 = vld [vmem:[#allocation6 + $0x78] sm:$0xff]
    %v109 = vld [vmem:[#allocation6 + $0x80] sm:$0xff]
    %v110 = vld [vmem:[#allocation6 + $0x88] sm:$0xff]
    %v111 = vld [vmem:[#allocation6 + $0x90] sm:$0xff]
    %v112 = vld [vmem:[#allocation6 + $0x98] sm:$0xff]
    %v113 = vld [vmem:[#allocation6 + $0xa0] sm:$0xff]
    %v114 = vld [vmem:[#allocation6 + $0xa8] sm:$0xff]
    %v115 = vld [vmem:[#allocation6 + $0xb0] sm:$0xff]
    %v116 = vld [vmem:[#allocation6 + $0xb8] sm:$0xff]
    %v117 = vld [vmem:[#allocation6 + $0xc0] sm:$0xff]
    %v118 = vld [vmem:[#allocation6 + $0xc8] sm:$0xff]
    %v119 = vld [vmem:[#allocation6 + $0xd0] sm:$0xff]
    %v120 = vld [vmem:[#allocation6 + $0xd8] sm:$0xff]
    %v121 = vld [vmem:[#allocation6 + $0xe0] sm:$0xff]
    %v122 = vld [vmem:[#allocation6 + $0xe8] sm:$0xff]
    %v123 = vld [vmem:[#allocation6 + $0xf0] sm:$0xff]
    %v124 = vld [vmem:[#allocation6 + $0xf8] sm:$0xff]
    %125 = vmatprep.subr.mxu0 0.0
    %126 = vmatpush1.xpose.msra.mxu0 %v93
    %127 = vmatprep.subr.mxu0 0.0
    %128 = vmatpush1.xpose.msra.mxu0 %v94
    %129 = vmatprep.subr.mxu0 0.0
    %130 = vmatpush1.xpose.msra.mxu0 %v95
    %131 = vmatprep.subr.mxu0 0.0
    %132 = vmatpush1.xpose.msra.mxu0 %v96
    %133 = vmatprep.subr.mxu0 0.0
    %134 = vmatpush1.xpose.msra.mxu0 %v97
    %135 = vmatprep.subr.mxu0 0.0
    %136 = vmatpush1.xpose.msra.mxu0 %v98
    %137 = vmatprep.subr.mxu0 0.0
    %138 = vmatpush1.xpose.msra.mxu0 %v99
    %139 = vmatprep.subr.mxu0 0.0
    %140 = vmatpush1.xpose.msra.mxu0 %v100
    %141 = vmatprep.subr.mxu0 0.0
    %142 = vmatpush1.xpose.msra.mxu0 %v101
    %143 = vmatprep.subr.mxu0 0.0
    %144 = vmatpush1.xpose.msra.mxu0 %v102
    %145 = vmatprep.subr.mxu0 0.0
    %146 = vmatpush1.xpose.msra.mxu0 %v103
    %147 = vmatprep.subr.mxu0 0.0
    %148 = vmatpush1.xpose.msra.mxu0 %v104
    %149 = vmatprep.subr.mxu0 0.0
    %150 = vmatpush1.xpose.msra.mxu0 %v105
    %151 = vmatprep.subr.mxu0 0.0
    %152 = vmatpush1.xpose.msra.mxu0 %v106
    %153 = vmatprep.subr.mxu0 0.0
    %154 = vmatpush1.xpose.msra.mxu0 %v107
    %155 = vmatprep.subr.mxu0 0.0
    %156 = vmatpush1.xpose.msra.mxu0 %v108
    %157 = vmatprep.subr.mxu0 0.0
    %158 = vmatpush1.xpose.msra.mxu0 %v109
    %159 = vmatprep.subr.mxu0 0.0
    %160 = vmatpush1.xpose.msra.mxu0 %v110
    %161 = vmatprep.subr.mxu0 0.0
    %162 = vmatpush1.xpose.msra.mxu0 %v111
    %163 = vmatprep.subr.mxu0 0.0
    %164 = vmatpush1.xpose.msra.mxu0 %v112
    %165 = vmatprep.subr.mxu0 0.0
    %166 = vmatpush1.xpose.msra.mxu0 %v113
    %167 = vmatprep.subr.mxu0 0.0
    %168 = vmatpush1.xpose.msra.mxu0 %v114
    %169 = vmatprep.subr.mxu0 0.0
    %170 = vmatpush1.xpose.msra.mxu0 %v115
    %171 = vmatprep.subr.mxu0 0.0
    %172 = vmatpush1.xpose.msra.mxu0 %v116
    %173 = vmatprep.subr.mxu0 0.0
    %174 = vmatpush1.xpose.msra.mxu0 %v117
    %175 = vmatprep.subr.mxu0 0.0
    %176 = vmatpush1.xpose.msra.mxu0 %v118
    %177 = vmatprep.subr.mxu0 0.0
    %178 = vmatpush1.xpose.msra.mxu0 %v119
    %179 = vmatprep.subr.mxu0 0.0
    %180 = vmatpush1.xpose.msra.mxu0 %v120
    %181 = vmatprep.subr.mxu0 0.0
    %182 = vmatpush1.xpose.msra.mxu0 %v121
    %183 = vmatprep.subr.mxu0 0.0
    %184 = vmatpush1.xpose.msra.mxu0 %v122
    %185 = vmatprep.subr.mxu0 0.0
    %186 = vmatpush1.xpose.msra.mxu0 %v123
    %187 = vmatprep.subr.mxu0 0.0
    %188 = vmatpush1.xpose.msra.mxu0 %v124
    %189 = vmatprep.mubr.f32.mxu0 0.0
    %190 = vmatmul.mubr.f32.gmra.mrb[0].mxu0 %v85
    %v191 = vpop.f32.mrb[0].mxu0
    %v192 = vadd.f32 0.0, %v191
    %v193 = vpop.f32.mrb[0].mxu0
    %v194 = vadd.f32 0.0, %v193
    %195 = vmatprep.mubr.f32.mxu0 0.0
    %196 = vmatmul.mubr.f32.gmra.mrb[0].mxu0 %v86
    %v197 = vpop.f32.mrb[0].mxu0
    %v198 = vadd.f32 0.0, %v197
    %v199 = vpop.f32.mrb[0].mxu0
    %v200 = vadd.f32 0.0, %v199
    %201 = vmatprep.mubr.f32.mxu0 0.0
    %202 = vmatmul.mubr.f32.gmra.mrb[0].mxu0 %v87
    %v203 = vpop.f32.mrb[0].mxu0
    %v204 = vadd.f32 0.0, %v203
    %v205 = vpop.f32.mrb[0].mxu0
    %v206 = vadd.f32 0.0, %v205
    %207 = vmatprep.mubr.f32.mxu0 0.0
    %208 = vmatmul.mubr.f32.gmra.mrb[0].mxu0 %v88
    %v209 = vpop.f32.mrb[0].mxu0
    %v210 = vadd.f32 0.0, %v209
    %v211 = vpop.f32.mrb[0].mxu0
    %v212 = vadd.f32 0.0, %v211
    %213 = vmatprep.mubr.f32.mxu0 0.0
    %214 = vmatmul.mubr.f32.gmra.mrb[0].mxu0 %v89
    %v215 = vpop.f32.mrb[0].mxu0
    %v216 = vadd.f32 0.0, %v215
    %v217 = vpop.f32.mrb[0].mxu0
    %v218 = vadd.f32 0.0, %v217
    %219 = vmatprep.mubr.f32.mxu0 0.0
    %220 = vmatmul.mubr.f32.gmra.mrb[0].mxu0 %v90
    %v221 = vpop.f32.mrb[0].mxu0
    %v222 = vadd.f32 0.0, %v221
    %v223 = vpop.f32.mrb[0].mxu0
    %v224 = vadd.f32 0.0, %v223
    %225 = vmatprep.mubr.f32.mxu0 0.0
    %226 = vmatmul.mubr.f32.gmra.mrb[0].mxu0 %v91
    %v227 = vpop.f32.mrb[0].mxu0
    %v228 = vadd.f32 0.0, %v227
    %v229 = vpop.f32.mrb[0].mxu0
    %v230 = vadd.f32 0.0, %v229
    %231 = vmatprep.mubr.f32.mxu0 0.0
    %232 = vmatmul.mubr.f32.gmra.mrb[0].mxu0 %v92
    %v233 = vpop.f32.mrb[0].mxu0
    %v234 = vadd.f32 0.0, %v233
    %v235 = vpop.f32.mrb[0].mxu0
    %v236 = vadd.f32 0.0, %v235
    %237 = vdwg.mxu0
    %v238 = vadd.f32 %v69, %v192
    %v239 = vadd.f32 %v70, %v194
    %v240 = vadd.f32 %v71, %v198
    %v241 = vadd.f32 %v72, %v200
    %v242 = vadd.f32 %v73, %v204
    %v243 = vadd.f32 %v74, %v206
    %v244 = vadd.f32 %v75, %v210
    %v245 = vadd.f32 %v76, %v212
    %v246 = vadd.f32 %v77, %v216
    %v247 = vadd.f32 %v78, %v218
    %v248 = vadd.f32 %v79, %v222
    %v249 = vadd.f32 %v80, %v224
    %v250 = vadd.f32 %v81, %v228
    %v251 = vadd.f32 %v82, %v230
    %v252 = vadd.f32 %v83, %v234
    %v253 = vadd.f32 %v84, %v236
    %254 = vst [vmem:[#allocation2] sm:$0xff] %v238
    %255 = vst [vmem:[#allocation2 + $0x8] sm:$0xff] %v239
    %256 = vst [vmem:[#allocation2 + $0x10] sm:$0xff] %v240
    %257 = vst [vmem:[#allocation2 + $0x18] sm:$0xff] %v241
    %258 = vst [vmem:[#allocation2 + $0x20] sm:$0xff] %v242
    %259 = vst [vmem:[#allocation2 + $0x28] sm:$0xff] %v243
    %260 = vst [vmem:[#allocation2 + $0x30] sm:$0xff] %v244
    %261 = vst [vmem:[#allocation2 + $0x38] sm:$0xff] %v245
    %262 = vst [vmem:[#allocation2 + $0x40] sm:$0xff] %v246
    %263 = vst [vmem:[#allocation2 + $0x48] sm:$0xff] %v247
    %264 = vst [vmem:[#allocation2 + $0x50] sm:$0xff] %v248
    %265 = vst [vmem:[#allocation2 + $0x58] sm:$0xff] %v249
    %266 = vst [vmem:[#allocation2 + $0x60] sm:$0xff] %v250
    %267 = vst [vmem:[#allocation2 + $0x68] sm:$0xff] %v251
    %268 = vst [vmem:[#allocation2 + $0x70] sm:$0xff] %v252
    %269 = vst [vmem:[#allocation2 + $0x78] sm:$0xff] %v253
    // Predicated region
    $region34: #{tpu_custom_call.1} parent=1 // pred_check
      %p270 = pneg %p49
    $region35: #{tpu_custom_call.1} parent=1 // pred_check_branch
      %272 = sbr.rel (%p270) target = $region37
    $region36: #{tpu_custom_call.1} parent=1 // pred_region
      %v273 = vld [vmem:[#allocation2] sm:$0xff]
      %v274 = vld [vmem:[#allocation2 + $0x8] sm:$0xff]
      %v275 = vld [vmem:[#allocation2 + $0x10] sm:$0xff]
      %v276 = vld [vmem:[#allocation2 + $0x18] sm:$0xff]
      %v277 = vld [vmem:[#allocation2 + $0x20] sm:$0xff]
      %v278 = vld [vmem:[#allocation2 + $0x28] sm:$0xff]
      %v279 = vld [vmem:[#allocation2 + $0x30] sm:$0xff]
      %v280 = vld [vmem:[#allocation2 + $0x38] sm:$0xff]
      %v281 = vld [vmem:[#allocation2 + $0x40] sm:$0xff]
      %v282 = vld [vmem:[#allocation2 + $0x48] sm:$0xff]
      %v283 = vld [vmem:[#allocation2 + $0x50] sm:$0xff]
      %v284 = vld [vmem:[#allocation2 + $0x58] sm:$0xff]
      %v285 = vld [vmem:[#allocation2 + $0x60] sm:$0xff]
      %v286 = vld [vmem:[#allocation2 + $0x68] sm:$0xff]
      %v287 = vld [vmem:[#allocation2 + $0x70] sm:$0xff]
      %v288 = vld [vmem:[#allocation2 + $0x78] sm:$0xff]
      %v289 = vld [vmem:[%s2] sm:$0x3]
      %v291 = vlaneseq
      %v292 = vshrl.u32 %v291, 7
      %v293 = vsub.s32 0, %v292
      %v294 = vrot.slane %v289, %v293
      %v295 = vlaneseq
      %v296 = vshrl.u32 %v295, 7
      %v297 = vsub.s32 1, %v296
      %v298 = vrot.slane %v289, %v297
      %v301 = vadd.f32 %v273, %v294
      %v302 = vadd.f32 %v274, %v298
      %v303 = vadd.f32 %v275, %v294
      %v304 = vadd.f32 %v276, %v298
      %v305 = vadd.f32 %v277, %v294
      %v306 = vadd.f32 %v278, %v298
      %v307 = vadd.f32 %v279, %v294
      %v308 = vadd.f32 %v280, %v298
      %v309 = vadd.f32 %v281, %v294
      %v310 = vadd.f32 %v282, %v298
      %v311 = vadd.f32 %v283, %v294
      %v312 = vadd.f32 %v284, %v298
      %v313 = vadd.f32 %v285, %v294
      %v314 = vadd.f32 %v286, %v298
      %v315 = vadd.f32 %v287, %v294
      %v316 = vadd.f32 %v288, %v298
      %v317 = vmul.f32 %v301, 0.01
      %v318 = vmul.f32 %v302, 0.01
      %v319 = vmul.f32 %v303, 0.01
      %v320 = vmul.f32 %v304, 0.01
      %v321 = vmul.f32 %v305, 0.01
      %v322 = vmul.f32 %v306, 0.01
      %v323 = vmul.f32 %v307, 0.01
      %v324 = vmul.f32 %v308, 0.01
      %v325 = vmul.f32 %v309, 0.01
      %v326 = vmul.f32 %v310, 0.01
      %v327 = vmul.f32 %v311, 0.01
      %v328 = vmul.f32 %v312, 0.01
      %v329 = vmul.f32 %v313, 0.01
      %v330 = vmul.f32 %v314, 0.01
      %v331 = vmul.f32 %v315, 0.01
      %v332 = vmul.f32 %v316, 0.01
      %v333 = vmax.f32 %v301, %v317
      %v334 = vmax.f32 %v302, %v318
      %v335 = vmax.f32 %v303, %v319
      %v336 = vmax.f32 %v304, %v320
      %v337 = vmax.f32 %v305, %v321
      %v338 = vmax.f32 %v306, %v322
      %v339 = vmax.f32 %v307, %v323
      %v340 = vmax.f32 %v308, %v324
      %v341 = vmax.f32 %v309, %v325
      %v342 = vmax.f32 %v310, %v326
      %v343 = vmax.f32 %v311, %v327
      %v344 = vmax.f32 %v312, %v328
      %v345 = vmax.f32 %v313, %v329
      %v346 = vmax.f32 %v314, %v330
      %v347 = vmax.f32 %v315, %v331
      %v348 = vmax.f32 %v316, %v332
      %v349 = vadd.f32 %v333, %v335
      %v350 = vadd.f32 %v349, %v337
      %v351 = vadd.f32 %v350, %v339
      %v352 = vadd.f32 %v351, %v341
      %v353 = vadd.f32 %v352, %v343
      %v354 = vadd.f32 %v353, %v345
      %v355 = vadd.f32 %v354, %v347
      %v356 = vrot.slane %v355, 4
      %v357 = vadd.f32 %v355, %v356
      %v358 = vrot.slane %v357, 2
      %v359 = vadd.f32 %v357, %v358
      %v360 = vrot.slane %v359, 1
      %v361 = vadd.f32 %v359, %v360
      %v362 = vadd.f32 %v334, %v336
      %v363 = vadd.f32 %v362, %v338
      %v364 = vadd.f32 %v363, %v340
      %v365 = vadd.f32 %v364, %v342
      %v366 = vadd.f32 %v365, %v344
      %v367 = vadd.f32 %v366, %v346
      %v368 = vadd.f32 %v367, %v348
      %v369 = vrot.slane %v368, 4
      %v370 = vadd.f32 %v368, %v369
      %v371 = vrot.slane %v370, 2
      %v372 = vadd.f32 %v370, %v371
      %v373 = vrot.slane %v372, 1
      %v374 = vadd.f32 %v372, %v373
      %v375 = vmul.f32 %v333, %v333
      %v376 = vmul.f32 %v334, %v334
      %v377 = vmul.f32 %v335, %v335
      %v378 = vmul.f32 %v336, %v336
      %v379 = vmul.f32 %v337, %v337
      %v380 = vmul.f32 %v338, %v338
      %v381 = vmul.f32 %v339, %v339
      %v382 = vmul.f32 %v340, %v340
      %v383 = vmul.f32 %v341, %v341
      %v384 = vmul.f32 %v342, %v342
      %v385 = vmul.f32 %v343, %v343
      %v386 = vmul.f32 %v344, %v344
      %v387 = vmul.f32 %v345, %v345
      %v388 = vmul.f32 %v346, %v346
      %v389 = vmul.f32 %v347, %v347
      %v390 = vmul.f32 %v348, %v348
      %v391 = vadd.f32 %v375, %v377
      %v392 = vadd.f32 %v391, %v379
      %v393 = vadd.f32 %v392, %v381
      %v394 = vadd.f32 %v393, %v383
      %v395 = vadd.f32 %v394, %v385
      %v396 = vadd.f32 %v395, %v387
      %v397 = vadd.f32 %v396, %v389
      %v398 = vrot.slane %v397, 4
      %v399 = vadd.f32 %v397, %v398
      %v400 = vrot.slane %v399, 2
      %v401 = vadd.f32 %v399, %v400
      %v402 = vrot.slane %v401, 1
      %v403 = vadd.f32 %v401, %v402
      %v404 = vadd.f32 %v376, %v378
      %v405 = vadd.f32 %v404, %v380
      %v406 = vadd.f32 %v405, %v382
      %v407 = vadd.f32 %v406, %v384
      %v408 = vadd.f32 %v407, %v386
      %v409 = vadd.f32 %v408, %v388
      %v410 = vadd.f32 %v409, %v390
      %v411 = vrot.slane %v410, 4
      %v412 = vadd.f32 %v410, %v411
      %v413 = vrot.slane %v412, 2
      %v414 = vadd.f32 %v412, %v413
      %v415 = vrot.slane %v414, 1
      %v416 = vadd.f32 %v414, %v415
      %v417 = vmul.f32 %v361, 0.015625
      %v418 = vmul.f32 %v374, 0.015625
      %v419 = vmul.f32 %v403, 0.015625
      %v420 = vmul.f32 %v416, 0.015625
      %v421 = vmul.f32 %v417, %v417
      %v422 = vmul.f32 %v418, %v418
      %v423 = vsub.f32 %v419, %v421
      %v424 = vsub.f32 %v420, %v422
      %v425 = vmax.f32 %v423, 0.0
      %v426 = vmax.f32 %v424, 0.0
      %v427 = vld [vmem:[%s3] sm:$0x3]
      %v428 = vadd.f32 %v425, 1e-05
      %v429 = vadd.f32 %v426, 1e-05
      %v430 = vrsqrt.pop %v428
      %v431 = vrsqrt.pop %v429
      %v434 = vcombine.low %v430, %v431
      %v436 = vunpack.c.l.s4 1966171168
      %v437 = vunpack.c.0.s8 %v436
      %v438 = vlaneseq
      %v439 = vshrl.u32 %v438, 7
      %v440 = vsub.s32 %v437, %v439
      %v441 = vrot.slane %v434, %v440
      %v443 = vunpack.c.l.s4 1966171168
      %v444 = vunpack.c.0.s8 %v443
      %v445 = vlaneseq
      %v446 = vshrl.u32 %v445, 7
      %v447 = vsub.s32 %v444, %v446
      %v448 = vrot.slane %v441, %v447
      %v450 = vmul.f32 %v427, %v448
      %v451 = vld [vmem:[%s4] sm:$0x3]
      %v453 = vlaneseq
      %v454 = vshrl.u32 %v453, 7
      %v455 = vsub.s32 0, %v454
      %v456 = vrot.slane %v450, %v455
      %v457 = vlaneseq
      %v458 = vshrl.u32 %v457, 7
      %v459 = vsub.s32 1, %v458
      %v460 = vrot.slane %v450, %v459
      %v463 = vmul.f32 %v417, %v456
      %v464 = vmul.f32 %v418, %v460
      %v467 = vcombine.low %v463, %v464
      %v469 = vunpack.c.l.s4 1966171168
      %v470 = vunpack.c.0.s8 %v469
      %v471 = vlaneseq
      %v472 = vshrl.u32 %v471, 7
      %v473 = vsub.s32 %v470, %v472
      %v474 = vrot.slane %v467, %v473
      %v476 = vunpack.c.l.s4 1966171168
      %v477 = vunpack.c.0.s8 %v476
      %v478 = vlaneseq
      %v479 = vshrl.u32 %v478, 7
      %v480 = vsub.s32 %v477, %v479
      %v481 = vrot.slane %v474, %v480
      %v483 = vsub.f32 %v451, %v481
      %v484 = vmul.f32 %v333, %v456
      %v485 = vmul.f32 %v334, %v460
      %v486 = vmul.f32 %v335, %v456
      %v487 = vmul.f32 %v336, %v460
      %v488 = vmul.f32 %v337, %v456
      %v489 = vmul.f32 %v338, %v460
      %v490 = vmul.f32 %v339, %v456
      %v491 = vmul.f32 %v340, %v460
      %v492 = vmul.f32 %v341, %v456
      %v493 = vmul.f32 %v342, %v460
      %v494 = vmul.f32 %v343, %v456
      %v495 = vmul.f32 %v344, %v460
      %v496 = vmul.f32 %v345, %v456
      %v497 = vmul.f32 %v346, %v460
      %v498 = vmul.f32 %v347, %v456
      %v499 = vmul.f32 %v348, %v460
      %v501 = vlaneseq
      %v502 = vshrl.u32 %v501, 7
      %v503 = vsub.s32 0, %v502
      %v504 = vrot.slane %v483, %v503
      %v505 = vlaneseq
      %v506 = vshrl.u32 %v505, 7
      %v507 = vsub.s32 1, %v506
      %v508 = vrot.slane %v483, %v507
      %v511 = vadd.f32 %v484, %v504
      %v512 = vadd.f32 %v485, %v508
      %v513 = vadd.f32 %v486, %v504
      %v514 = vadd.f32 %v487, %v508
      %v515 = vadd.f32 %v488, %v504
      %v516 = vadd.f32 %v489, %v508
      %v517 = vadd.f32 %v490, %v504
      %v518 = vadd.f32 %v491, %v508
      %v519 = vadd.f32 %v492, %v504
      %v520 = vadd.f32 %v493, %v508
      %v521 = vadd.f32 %v494, %v504
      %v522 = vadd.f32 %v495, %v508
      %v523 = vadd.f32 %v496, %v504
      %v524 = vadd.f32 %v497, %v508
      %v525 = vadd.f32 %v498, %v504
      %v526 = vadd.f32 %v499, %v508
      %527 = vst [vmem:[#allocation8] sm:$0xff] %v511
      %528 = vst [vmem:[#allocation8 + $0x8] sm:$0xff] %v512
      %529 = vst [vmem:[#allocation8 + $0x10] sm:$0xff] %v513
      %530 = vst [vmem:[#allocation8 + $0x18] sm:$0xff] %v514
      %531 = vst [vmem:[#allocation8 + $0x20] sm:$0xff] %v515
      %532 = vst [vmem:[#allocation8 + $0x28] sm:$0xff] %v516
      %533 = vst [vmem:[#allocation8 + $0x30] sm:$0xff] %v517
      %534 = vst [vmem:[#allocation8 + $0x38] sm:$0xff] %v518
      %535 = vst [vmem:[#allocation8 + $0x40] sm:$0xff] %v519
      %536 = vst [vmem:[#allocation8 + $0x48] sm:$0xff] %v520
      %537 = vst [vmem:[#allocation8 + $0x50] sm:$0xff] %v521
      %538 = vst [vmem:[#allocation8 + $0x58] sm:$0xff] %v522
      %539 = vst [vmem:[#allocation8 + $0x60] sm:$0xff] %v523
      %540 = vst [vmem:[#allocation8 + $0x68] sm:$0xff] %v524
      %541 = vst [vmem:[#allocation8 + $0x70] sm:$0xff] %v525
      %542 = vst [vmem:[#allocation8 + $0x78] sm:$0xff] %v526
    $region37: #{tpu_custom_call.1} parent=1 // pred_fallthru
      _
    // Predicated region
    $region38: #{tpu_custom_call.1} parent=1 // pred_check
      _
    $region39: #{tpu_custom_call.1} parent=1 // pred_check_branch
      %544 = sbr.rel (0) target = $region41
    $region40: #{tpu_custom_call.1} parent=1 // pred_region
      %s546 = ssub.s32 2048, 2048
      %547 = vsyncadd [#allocation5], %s546
      %s548 = sshll.u32 [#allocation8], 4
      %s549 = int_to_ptr.vmem [resolvable:$true] %s548
      %554 = dma.vmem_to_hbm [thread:$0]  %s549, 2048, %s5, [#allocation5], 256, 256, 16
    $region41: #{tpu_custom_call.1} parent=1 // pred_fallthru
      _
    // Predicated region
    $region42: #{tpu_custom_call.1} parent=1 // pred_check
      _
    $region43: #{tpu_custom_call.1} parent=1 // pred_check_branch
      %556 = sbr.rel (0) target = $region45
    $region44: #{tpu_custom_call.1} parent=1 // pred_region
      %557 = dma.done [#allocation5], 2048
    $region45: #{tpu_custom_call.1} parent=1 // pred_fallthru
      _
    %558 = vsyncpa [#allocation4], 1
    %559 = vsyncpa [#allocation7], 1
    %560 = vsyncpa [#allocation5], 1

</llo_original>
